<compile_context>
chip_gen: v6e
topology: v6e:2x2x1
jax: 0.10.0
libtpu: 0.0.40
codegen_flags: <defaults>
</compile_context>

<pallas_src>
import jax
import jax.numpy as jnp
from jax.experimental import pallas as pl
from jax.experimental.pallas import tpu as pltpu


def _lsep_partial_kernel(s_ref, l_ref, out_ref):
    """out[b,i] = exp(s[b,i]) * sum_j [labels[b,j] > labels[b,i]] * exp(-s[b,j])."""
    s = s_ref[...]                       # (TB, C) f32
    l = l_ref[...]                       # (TB, C) f32

    # Factor the exponential: exp(s_i - s_j) = exp(s_i) * exp(-s_j)  (EUP: 2C ops).
    e_pos = jnp.exp(s)                   # (TB, C)
    e_neg = jnp.exp(-s)                  # (TB, C)

    # mask[b, i, j] = labels[b, j] > labels[b, i]
    mask = l[:, None, :] > l[:, :, None]                     # (TB, C, C)

    # t[b, i] = sum_j mask[b,i,j] * exp(-s[b,j])   (VPU select + lane reduce)
    weighted = jnp.where(mask, e_neg[:, None, :], 0.0)       # (TB, C, C)
    t = jnp.sum(weighted, axis=-1)                           # (TB, C)

    # Per-(b, i) partial contributions; global reduce + log happen in wrapper.
    out_ref[...] = e_pos * t
    # TODO(synk): for very large C (>~1k classes) additionally tile the (C, C)
    # pairwise axes and/or push the masked sum onto the MXU as a batched matvec.


def lsep_loss(scores, labels, reduction="mean", batch_tile=8):
    assert scores.shape == labels.shape and scores.ndim == 2
    assert batch_tile % 8 == 0
    B, C = scores.shape
    s = scores.astype(jnp.float32)
    l = labels.astype(jnp.float32)

    # Keep the (TB, C, C) in-kernel intermediates modest in VMEM (~4 MiB cap),
    # while keeping TB a multiple of 8 (sublane tiling rule).
    cap = max(8, ((4 << 20) // (4 * C * C)) // 8 * 8)
    batch_tile = min(batch_tile, cap)

    if B <= batch_tile:
        tb, n_chunks = B, 1
    else:
        tb, n_chunks = batch_tile, pl.cdiv(B, batch_tile)

    b_pad = tb * n_chunks
    if b_pad != B:
        # Zero-padded rows: labels all equal -> mask all False -> zero partials.
        pad = ((0, b_pad - B), (0, 0))
        s = jnp.pad(s, pad)
        l = jnp.pad(l, pad)

    partials = pl.pallas_call(
        _lsep_partial_kernel,
        out_shape=jax.ShapeDtypeStruct((b_pad, C), jnp.float32),
        grid=(n_chunks,),
        in_specs=[
            pl.BlockSpec((tb, C), lambda i: (i, 0)),
            pl.BlockSpec((tb, C), lambda i: (i, 0)),
        ],
        out_specs=pl.BlockSpec((tb, C), lambda i: (i, 0)),
        compiler_params=pltpu.CompilerParams(
            dimension_semantics=("parallel",)),
    )(s, l)

    # Matches PyTorch: log(1 + sum exp(diff) * mask).  No LSE stabilisation,
    # by design, to keep fidelity with the reference module (it doesn't either).
    loss = jnp.log(jnp.sum(partials) + 1.0)

    if reduction in ("mean", "none"):
        # .mean() of a 0-d tensor is the tensor itself.
        return loss
    raise NotImplementedError(reduction)


def _lsep_reference(scores, labels):
    """Pure-JAX reference mirroring the PyTorch forward."""
    s = scores.astype(jnp.float32)
    l = labels.astype(jnp.float32)
    mask = (l[:, None, :] - l[:, :, None]) > 0.0   # [b,i,j] = l[b,j] > l[b,i]
    diff = s[:, :, None] - s[:, None, :]           # [b,i,j] = s[b,i] - s[b,j]
    return jnp.log(jnp.sum(jnp.exp(diff) * mask) + 1.0)


if __name__ == "__main__":
    key = jax.random.PRNGKey(0)
    k1, k2, k3, k4 = jax.random.split(key, 4)

    # Case 1: nominal small shape (batch=2, num_classes=8).
    B, C = 2, 8
    scores = jax.random.normal(k1, (B, C), dtype=jnp.float32)
    labels = (jax.random.uniform(k2, (B, C)) > 0.5).astype(jnp.float32)
    loss = jax.block_until_ready(lsep_loss(scores, labels, reduction="mean"))
    ref = jax.block_until_ready(_lsep_reference(scores, labels))
    assert jnp.allclose(loss, ref, rtol=1e-5, atol=1e-5), (loss, ref)

    # Case 2: exercises batch tiling (2 grid chunks) and padding (12 -> 16 rows).
    B2, C2 = 12, 16
    scores2 = jax.random.normal(k3, (B2, C2), dtype=jnp.float32)
    labels2 = (jax.random.uniform(k4, (B2, C2)) > 0.5).astype(jnp.float32)
    loss2 = jax.block_until_ready(lsep_loss(scores2, labels2, reduction="mean"))
    ref2 = jax.block_until_ready(_lsep_reference(scores2, labels2))
    assert jnp.allclose(loss2, ref2, rtol=1e-5, atol=1e-5), (loss2, ref2)

    print("KERNEL_OK")
</pallas_src>

<mosaic_0001>
module attributes {stable_mosaic.version = 11 : i64} {
  func.func @_lsep_partial_kernel(%arg0: i32, %arg1: memref<2x8xf32, #tpu.memory_space<vmem>>, %arg2: memref<2x8xf32, #tpu.memory_space<vmem>>, %arg3: memref<2x8xf32, #tpu.memory_space<vmem>>) attributes {dimension_semantics = [#tpu.dimension_semantics<parallel>], iteration_bounds = array<i64: 1>, scalar_prefetch = 0 : i64, scratch_operands = 0 : i64, tpu.core_type = #tpu.core_type<tc>, window_params = [{transform_indices = @transform_0, window_bounds = array<i64: 2, 8>}, {transform_indices = @transform_1, window_bounds = array<i64: 2, 8>}, {transform_indices = @transform_2, window_bounds = array<i64: 2, 8>}]} {
    %c0 = arith.constant 0 : index
    %c0_0 = arith.constant 0 : index
    %0 = vector.load %arg1[%c0, %c0_0] : memref<2x8xf32, #tpu.memory_space<vmem>>, vector<2x8xf32>
    %c0_1 = arith.constant 0 : index
    %c0_2 = arith.constant 0 : index
    %1 = vector.load %arg2[%c0_1, %c0_2] : memref<2x8xf32, #tpu.memory_space<vmem>>, vector<2x8xf32>
    %2 = math.exp %0 : vector<2x8xf32>
    %cst = arith.constant 0.000000e+00 : f32
    %3 = vector.broadcast %cst : f32 to vector<2x8xf32>
    %4 = arith.subf %3, %0 : vector<2x8xf32>
    %5 = math.exp %4 : vector<2x8xf32>
    %6 = vector.shape_cast %1 : vector<2x8xf32> to vector<2x1x8xf32>
    %7 = vector.shape_cast %1 : vector<2x8xf32> to vector<2x8x1xf32>
    %8 = vector.broadcast %6 : vector<2x1x8xf32> to vector<2x8x8xf32>
    %9 = vector.broadcast %7 : vector<2x8x1xf32> to vector<2x8x8xf32>
    %10 = arith.cmpf ogt, %8, %9 : vector<2x8x8xf32>
    %11 = vector.shape_cast %5 : vector<2x8xf32> to vector<2x1x8xf32>
    %cst_3 = arith.constant 0.000000e+00 : f32
    %12 = vector.shape_cast %11 : vector<2x1x8xf32> to vector<2x1x8xf32>
    %13 = vector.broadcast %12 : vector<2x1x8xf32> to vector<2x8x8xf32>
    %14 = vector.broadcast %cst_3 : f32 to vector<2x8x8xf32>
    %15 = arith.select %10, %13, %14 : vector<2x8x8xi1>, vector<2x8x8xf32>
    %cst_4 = arith.constant dense<0.000000e+00> : vector<2x8xf32>
    %16 = vector.multi_reduction <add>, %15, %cst_4 [2] : vector<2x8x8xf32> to vector<2x8xf32>
    %17 = arith.mulf %2, %16 : vector<2x8xf32>
    %c0_5 = arith.constant 0 : index
    %c0_6 = arith.constant 0 : index
    %18 = vector.load %arg3[%c0_5, %c0_6] : memref<2x8xf32, #tpu.memory_space<vmem>>, vector<2x8xf32>
    tpu.vector_store %arg3[%c0_5, %c0_6], %17 {strides = array<i32>} : memref<2x8xf32, #tpu.memory_space<vmem>>, vector<2x8xf32>,
    return
  }
  func.func @transform_0(%arg0: i32) -> (i32, i32) {
    %c0_i32 = arith.constant 0 : i32
    %c0_i32_0 = arith.constant 0 : i32
    return %arg0, %c0_i32 : i32, i32
  }
  func.func @transform_1(%arg0: i32) -> (i32, i32) {
    %c0_i32 = arith.constant 0 : i32
    %c0_i32_0 = arith.constant 0 : i32
    return %arg0, %c0_i32 : i32, i32
  }
  func.func @transform_2(%arg0: i32) -> (i32, i32) {
    %c0_i32 = arith.constant 0 : i32
    %c0_i32_0 = arith.constant 0 : i32
    return %arg0, %c0_i32 : i32, i32
  }
}

</mosaic_0001>

<llo_original>
// kernel: tpu_custom_call.1
$region0: #{tpu_custom_call.1}
  #allocation0 [shape = 'u32[]', space=smem, size = 0x4, offset = 0x4, fixed_abs, tag = 'smem constant byte address 0x4 - core index']
  #allocation1 [shape = 'u32[144,128]{1,0:T(1,128)}', space=vmem, size = 0x12000, scoped, tag = 'internal scratch']
  %s0 = inlined_call_operand.hbm [shape: f32[2,8], index: 0, kind: input, shape index: {}]
  %s1 = inlined_call_operand.hbm [shape: f32[2,8], index: 1, kind: input, shape index: {}]
  %s2 = inlined_call_operand.hbm [shape: f32[2,8], index: 2, kind: output, shape index: {}]
  %s3 = sld [smem:[#allocation0]]
  $region26: #{tpu_custom_call.1} parent=0
    _
  %s5 = ssub.s32 1, %s3
  %s6 = scalar_select 0, %s5, %s3
  $region1: #{tpu_custom_call.1} parent=0
    #allocation2 [shape = 'u8[1024]{0}', space=vmem, size = 0x400, scoped, tag = 'input window, operand 0, single buffered']
    #allocation3 [shape = 's32[1]{0}', space=sflag, size = 0x4, scoped, tag = 'scoped memory for tpu_custom_call.1']
    #allocation4 [shape = 's32[1]{0}', space=sflag, size = 0x4, scoped, tag = 'scoped memory for tpu_custom_call.1']
    #allocation5 [shape = 'u8[1024]{0}', space=vmem, size = 0x400, scoped, tag = 'input window, operand 1, single buffered']
    #allocation6 [shape = 's32[1]{0}', space=sflag, size = 0x4, scoped, tag = 'scoped memory for tpu_custom_call.1']
    #allocation7 [shape = 'u8[1024]{0}', space=vmem, size = 0x400, scoped, tag = 'output window, operand 0, single buffered']
    %7 = vsyncpa [#allocation3], 0
    %8 = vsyncpa [#allocation6], 0
    %9 = vsyncpa [#allocation4], 0
    // Predicated region
    $region2: #{tpu_custom_call.1} parent=1 // pred_check
      _
    $region3: #{tpu_custom_call.1} parent=1 // pred_check_branch
      %11 = sbr.rel (0) target = $region5
    $region4: #{tpu_custom_call.1} parent=1 // pred_region
      %s13 = ssub.s32 32, 32
      %14 = vsyncadd [#allocation3], %s13
      %s16 = sshll.u32 [#allocation2], 4
      %s17 = int_to_ptr.vmem [resolvable:$true] %s16
      %19 = dma.hbm_to_vmem [thread:$0]  %s0, 32, %s17, [#allocation3]
    $region5: #{tpu_custom_call.1} parent=1 // pred_fallthru
      _
    // Predicated region
    $region6: #{tpu_custom_call.1} parent=1 // pred_check
      _
    $region7: #{tpu_custom_call.1} parent=1 // pred_check_branch
      %21 = sbr.rel (0) target = $region9
    $region8: #{tpu_custom_call.1} parent=1 // pred_region
      %s23 = ssub.s32 32, 32
      %24 = vsyncadd [#allocation6], %s23
      %s26 = sshll.u32 [#allocation5], 4
      %s27 = int_to_ptr.vmem [resolvable:$true] %s26
      %29 = dma.hbm_to_vmem [thread:$0]  %s1, 32, %s27, [#allocation6]
    $region9: #{tpu_custom_call.1} parent=1 // pred_fallthru
      _
    // Predicated region
    $region10: #{tpu_custom_call.1} parent=1 // pred_check
      _
    $region11: #{tpu_custom_call.1} parent=1 // pred_check_branch
      %31 = sbr.rel (0) target = $region13
    $region12: #{tpu_custom_call.1} parent=1 // pred_region
      %32 = dma.done [#allocation3], 32
    $region13: #{tpu_custom_call.1} parent=1 // pred_fallthru
      _
    // Predicated region
    $region14: #{tpu_custom_call.1} parent=1 // pred_check
      _
    $region15: #{tpu_custom_call.1} parent=1 // pred_check_branch
      %34 = sbr.rel (0) target = $region17
    $region16: #{tpu_custom_call.1} parent=1 // pred_region
      %35 = dma.done [#allocation6], 32
    $region17: #{tpu_custom_call.1} parent=1 // pred_fallthru
      _
    %v36 = vld [vmem:[#allocation2] sm:$0x3]
    %v37 = vld [vmem:[#allocation5] sm:$0x3]
    %v38 = vmul.f32 %v36, 1.442695
    %v39 = vpow.pop %v38
    %v40 = vsub.f32 0.0, %v36
    %v41 = vmul.f32 %v40, 1.442695
    %v42 = vpow.pop %v41
    %v45 = vunpack.c.l.s4 1966171168
    %v46 = vunpack.c.0.s8 %v45
    %v47 = vlaneseq
    %v48 = vshrl.u32 %v47, 7
    %v49 = vsub.s32 %v46, %v48
    %v50 = vrot.slane %v37, %v49
    %v51 = vcombine.high %v50, %v50
    %v53 = vunpack.c.l.s4 1966171168
    %v54 = vunpack.c.0.s8 %v53
    %v55 = vlaneseq
    %v56 = vshrl.u32 %v55, 7
    %v57 = vsub.s32 %v54, %v56
    %v58 = vrot.slane %v50, %v57
    %v60 = vunpack.c.l.s4 1966171168
    %v61 = vunpack.c.0.s8 %v60
    %v62 = vlaneseq
    %v63 = vshrl.u32 %v62, 7
    %v64 = vsub.s32 %v61, %v63
    %v65 = vrot.slane %v51, %v64
    %v66 = vlaneseq
    %v67 = vshrl.u32 %v66, 7
    %v68 = vsub.s32 0, %v67
    %v69 = vrot.slane %v37, %v68
    %71 = vbcast.lane.b32.xlu0 %v69, 256
    %v72 = vpop.permute.xlu0 %71
    %v73 = vlaneseq
    %v74 = vshrl.u32 %v73, 7
    %v75 = vsub.s32 1, %v74
    %v76 = vrot.slane %v37, %v75
    %78 = vbcast.lane.b32.xlu0 %v76, 256
    %v79 = vpop.permute.xlu0 %78
    %v80 = vlaneseq
    %v81 = vshrl.u32 %v80, 7
    %v82 = vsub.s32 0, %v81
    %v83 = vrot.slane %v58, %v82
    %v84 = vlaneseq
    %v85 = vshrl.u32 %v84, 7
    %v86 = vsub.s32 0, %v85
    %v87 = vrot.slane %v65, %v86
    %vm90 = vcmp.gt.f32.partialorder %v83, %v72
    %vm91 = vcmp.gt.f32.partialorder %v87, %v79
    %v94 = vunpack.c.l.s4 1966171168
    %v95 = vunpack.c.0.s8 %v94
    %v96 = vlaneseq
    %v97 = vshrl.u32 %v96, 7
    %v98 = vsub.s32 %v95, %v97
    %v99 = vrot.slane %v42, %v98
    %v100 = vcombine.high %v99, %v99
    %v102 = vunpack.c.l.s4 1966171168
    %v103 = vunpack.c.0.s8 %v102
    %v104 = vlaneseq
    %v105 = vshrl.u32 %v104, 7
    %v106 = vsub.s32 %v103, %v105
    %v107 = vrot.slane %v99, %v106
    %v109 = vunpack.c.l.s4 1966171168
    %v110 = vunpack.c.0.s8 %v109
    %v111 = vlaneseq
    %v112 = vshrl.u32 %v111, 7
    %v113 = vsub.s32 %v110, %v112
    %v114 = vrot.slane %v100, %v113
    %v115 = vlaneseq
    %v116 = vshrl.u32 %v115, 7
    %v117 = vsub.s32 0, %v116
    %v118 = vrot.slane %v107, %v117
    %v119 = vlaneseq
    %v120 = vshrl.u32 %v119, 7
    %v121 = vsub.s32 0, %v120
    %v122 = vrot.slane %v114, %v121
    %v125 = vsel %vm90, %v118, 0.0
    %v126 = vsel %vm91, %v122, 0.0
    %vm127 = vcmask 64512
    %v128 = vsel %vm127, %v125, 0.0
    %129 = vadd.xlane.f32.xlu0 %v128
    %v130 = vpop.xlane.xlu0 %129
    %v131 = vsel %vm127, %v126, 0.0
    %132 = vadd.xlane.f32.xlu0 %v131
    %v133 = vpop.xlane.xlu0 %132
    %v136 = vlaneseq
    %v137 = vand.u32 %v136, 127
    %v138 = vlaneseq
    %v139 = vshrl.u32 %v138, 7
    %v140 = vsub.s32 %v137, %v139
    %v141 = vrot.slane %v130, %v140
    %v142 = vlaneseq
    %v143 = vshrl.u32 %v142, 7
    %v144 = vsub.s32 %v137, %v143
    %v145 = vrot.slane %v133, %v144
    %vm146 = vcmask 1041409
    %v147 = vsel %vm146, %v145, %v141
    %v149 = vmul.f32 %v39, %v147
    %vm150 = vcmask 58368
    %151 = vst.msk [vmem:[#allocation7] sm:$0x3] %vm150, %v149
    // Predicated region
    $region18: #{tpu_custom_call.1} parent=1 // pred_check
      _
    $region19: #{tpu_custom_call.1} parent=1 // pred_check_branch
      %153 = sbr.rel (0) target = $region21
    $region20: #{tpu_custom_call.1} parent=1 // pred_region
      %s155 = ssub.s32 32, 32
      %156 = vsyncadd [#allocation4], %s155
      %s158 = sshll.u32 [#allocation7], 4
      %s159 = int_to_ptr.vmem [resolvable:$true] %s158
      %161 = dma.vmem_to_hbm [thread:$0]  %s159, 32, %s2, [#allocation4]
    $region21: #{tpu_custom_call.1} parent=1 // pred_fallthru
      _
    // Predicated region
    $region22: #{tpu_custom_call.1} parent=1 // pred_check
      _
    $region23: #{tpu_custom_call.1} parent=1 // pred_check_branch
      %163 = sbr.rel (0) target = $region25
    $region24: #{tpu_custom_call.1} parent=1 // pred_region
      %164 = dma.done [#allocation4], 32
    $region25: #{tpu_custom_call.1} parent=1 // pred_fallthru
      _
    %165 = vsyncpa [#allocation3], 1
    %166 = vsyncpa [#allocation6], 1
    %167 = vsyncpa [#allocation4], 1

</llo_original>
